<compile_context>
chip_gen: v5e
topology: v5e:2x2
jax: 0.10.0
libtpu: 0.0.40
codegen_flags: <defaults>
</compile_context>

<pallas_src>
import functools

import jax
import jax.numpy as jnp
from jax.experimental import pallas as pl
from jax.experimental.pallas import tpu as pltpu


def _srelu1_kernel(x_ref, o_ref, *, threshold, inv_2t, half_t):
    x = x_ref[...]
    pos = jnp.where(x <= 0.0, jnp.zeros_like(x), x)
    # Multiply by a trace-time reciprocal instead of dividing -> pure VPU op.
    out = jnp.where(pos < threshold, pos * pos * inv_2t, pos - half_t)
    o_ref[...] = out


def srelu1(x, threshold: float = 1.0, *, target_block_bytes: int = 2 * 1024 * 1024):
    assert threshold > 0.0
    orig_shape = x.shape
    orig_dtype = x.dtype
    itemsize = jnp.dtype(orig_dtype).itemsize

    lane = 128
    # Packed min-tile sublane count: 8 for f32, 16 for bf16, 32 for int8/fp8.
    sublane = max(8, 32 // itemsize)

    flat = x.reshape(-1)
    n = flat.shape[0]

    # Only pad up to a multiple of the lane width (128); the common conv-style
    # shapes hit pad == 0 and skip the extra HBM pass entirely.
    pad = (-n) % lane
    if pad:
        # TODO(synk): for ragged n the tail could instead be masked in-kernel
        # (scalar-prefetched length); f(0)=0 keeps the padded path correct.
        flat = jnp.pad(flat, (0, pad))
    rows = flat.shape[0] // lane
    x2d = flat.reshape(rows, lane)

    # Row tile sized for ~target_block_bytes per block, aligned to the packed
    # sublane count.  f32 -> 4096 rows (2 MiB/block); bf16 -> 8192 rows.
    tr = max(sublane, (target_block_bytes // (lane * itemsize)) // sublane * sublane)
    if rows <= tr:
        # Single block equal to the full slab (always a legal block shape).
        tr = rows
        grid = (1,)
    else:
        # Fixed large tile + cdiv grid; Pallas masks the ragged edge block.
        grid = (pl.cdiv(rows, tr),)

    kernel = functools.partial(
        _srelu1_kernel,
        threshold=float(threshold),
        inv_2t=1.0 / (2.0 * float(threshold)),
        half_t=float(threshold) / 2.0,
    )

    out2d = pl.pallas_call(
        kernel,
        out_shape=jax.ShapeDtypeStruct((rows, lane), orig_dtype),
        grid_spec=pltpu.PrefetchScalarGridSpec(
            num_scalar_prefetch=0,
            grid=grid,
            in_specs=[pl.BlockSpec((tr, lane), lambda i: (i, 0))],
            out_specs=pl.BlockSpec((tr, lane), lambda i: (i, 0)),
        ),
        compiler_params=pltpu.CompilerParams(
            dimension_semantics=("parallel",)),
    )(x2d)

    out_flat = out2d.reshape(-1)
    if pad:
        out_flat = out_flat[:n]
    return out_flat.reshape(orig_shape)


def _srelu1_ref(x, threshold=1.0):
    out = jnp.where(x <= 0.0, jnp.zeros_like(x), x)
    out = jnp.where(out < threshold,
                    out * out / 2.0 / threshold,
                    out - threshold / 2.0)
    return out


if __name__ == "__main__":
    key = jax.random.PRNGKey(0)
    # NCHW input consistent with a conv-style activation: batch=2, C=4, 16x16.
    x = jax.random.normal(key, (2, 4, 16, 16), dtype=jnp.float32) * 2.0

    threshold = 1.0
    out = srelu1(x, threshold)
    out = jax.block_until_ready(out)

    ref = _srelu1_ref(x, threshold)
    assert out.shape == x.shape and out.dtype == x.dtype
    assert jnp.allclose(out, ref, atol=1e-6, rtol=1e-6)
    print("KERNEL_OK")
</pallas_src>

<mosaic_0001>
module attributes {stable_mosaic.version = 11 : i64} {
  func.func @_srelu1_kernel(%arg0: i32, %arg1: memref<16x128xf32, #tpu.memory_space<vmem>>, %arg2: memref<16x128xf32, #tpu.memory_space<vmem>>) attributes {dimension_semantics = [#tpu.dimension_semantics<parallel>], iteration_bounds = array<i64: 1>, scalar_prefetch = 0 : i64, scratch_operands = 0 : i64, tpu.core_type = #tpu.core_type<tc>, window_params = [{transform_indices = @transform_0, window_bounds = array<i64: 16, 128>}, {transform_indices = @transform_1, window_bounds = array<i64: 16, 128>}]} {
    %c0 = arith.constant 0 : index
    %c0_0 = arith.constant 0 : index
    %0 = vector.load %arg1[%c0, %c0_0] : memref<16x128xf32, #tpu.memory_space<vmem>>, vector<16x128xf32>
    %cst = arith.constant 0.000000e+00 : f32
    %1 = vector.broadcast %cst : f32 to vector<16x128xf32>
    %2 = arith.cmpf ole, %0, %1 : vector<16x128xf32>
    %cst_1 = arith.constant 0.000000e+00 : f32
    %3 = vector.broadcast %cst_1 : f32 to vector<16x128xf32>
    %4 = arith.select %2, %3, %0 : vector<16x128xi1>, vector<16x128xf32>
    %cst_2 = arith.constant 1.000000e+00 : f32
    %5 = vector.broadcast %cst_2 : f32 to vector<16x128xf32>
    %6 = arith.cmpf olt, %4, %5 : vector<16x128xf32>
    %7 = arith.mulf %4, %4 : vector<16x128xf32>
    %cst_3 = arith.constant 5.000000e-01 : f32
    %8 = vector.broadcast %cst_3 : f32 to vector<16x128xf32>
    %9 = arith.mulf %7, %8 : vector<16x128xf32>
    %cst_4 = arith.constant 5.000000e-01 : f32
    %10 = vector.broadcast %cst_4 : f32 to vector<16x128xf32>
    %11 = arith.subf %4, %10 : vector<16x128xf32>
    %12 = arith.select %6, %9, %11 : vector<16x128xi1>, vector<16x128xf32>
    %c0_5 = arith.constant 0 : index
    %c0_6 = arith.constant 0 : index
    %13 = vector.load %arg2[%c0_5, %c0_6] : memref<16x128xf32, #tpu.memory_space<vmem>>, vector<16x128xf32>
    tpu.vector_store %arg2[%c0_5, %c0_6], %12 {strides = array<i32>} : memref<16x128xf32, #tpu.memory_space<vmem>>, vector<16x128xf32>,
    return
  }
  func.func @transform_0(%arg0: i32) -> (i32, i32) {
    %c0_i32 = arith.constant 0 : i32
    %c0_i32_0 = arith.constant 0 : i32
    return %arg0, %c0_i32 : i32, i32
  }
  func.func @transform_1(%arg0: i32) -> (i32, i32) {
    %c0_i32 = arith.constant 0 : i32
    %c0_i32_0 = arith.constant 0 : i32
    return %arg0, %c0_i32 : i32, i32
  }
}

</mosaic_0001>

<llo_original>
// kernel: tpu_custom_call.1
$region0: #{tpu_custom_call.1}
  #allocation0 [shape = 'u32[]', space=smem, size = 0x4, offset = 0x4, fixed_abs, tag = 'smem constant byte address 0x4 - core index']
  #allocation1 [shape = 'u32[72,128]{1,0:T(1,128)}', space=vmem, size = 0x9000, scoped, tag = 'internal scratch']
  %s0 = inlined_call_operand.hbm [shape: f32[16,128], index: 0, kind: input, shape index: {}]
  %s1 = inlined_call_operand.hbm [shape: f32[16,128], index: 1, kind: output, shape index: {}]
  %s2 = sld [smem:[#allocation0]]
  $region18: #{tpu_custom_call.1} parent=0
    _
  %s4 = ssub.s32 1, %s2
  %s5 = scalar_select 0, %s4, %s2
  $region1: #{tpu_custom_call.1} parent=0
    #allocation2 [shape = 'u8[8192]{0}', space=vmem, size = 0x2000, scoped, tag = 'input window, operand 0, single buffered']
    #allocation3 [shape = 's32[1]{0}', space=sflag, size = 0x4, scoped, tag = 'scoped memory for tpu_custom_call.1']
    #allocation4 [shape = 's32[1]{0}', space=sflag, size = 0x4, scoped, tag = 'scoped memory for tpu_custom_call.1']
    #allocation5 [shape = 'u8[8192]{0}', space=vmem, size = 0x2000, scoped, tag = 'output window, operand 0, single buffered']
    %6 = vsyncpa [#allocation3], 0
    %7 = vsyncpa [#allocation4], 0
    // Predicated region
    $region2: #{tpu_custom_call.1} parent=1 // pred_check
      _
    $region3: #{tpu_custom_call.1} parent=1 // pred_check_branch
      %9 = sbr.rel (0) target = $region5
    $region4: #{tpu_custom_call.1} parent=1 // pred_region
      %11 = vsyncadd [#allocation3], 0
      %s12 = sshll.u32 %s0, 4
      %s13 = int_to_ptr.hbm [resolvable:$true] %s12
      %s14 = sshll.u32 [#allocation2], 4
      %s15 = int_to_ptr.vmem [resolvable:$true] %s14
      %20 = dma.hbm_to_vmem [thread:$0]  %s13, 256, %s15, [#allocation3], 128, 128, 8
    $region5: #{tpu_custom_call.1} parent=1 // pred_fallthru
      _
    // Predicated region
    $region6: #{tpu_custom_call.1} parent=1 // pred_check
      _
    $region7: #{tpu_custom_call.1} parent=1 // pred_check_branch
      %22 = sbr.rel (0) target = $region9
    $region8: #{tpu_custom_call.1} parent=1 // pred_region
      %24 = dma.done [#allocation3], 256
    $region9: #{tpu_custom_call.1} parent=1 // pred_fallthru
      _
    %v25 = vld [vmem:[#allocation2] sm:$0xff]
    %v26 = vld [vmem:[#allocation2 + $0x8] sm:$0xff]
    %vm27 = vcmp.le.f32.partialorder %v25, 0.0
    %vm28 = vcmp.le.f32.partialorder %v26, 0.0
    %v29 = vsel %vm27, 0.0, %v25
    %v30 = vsel %vm28, 0.0, %v26
    %vm31 = vcmp.lt.f32.partialorder %v29, 1.0
    %vm32 = vcmp.lt.f32.partialorder %v30, 1.0
    %v33 = vmul.f32 %v29, %v29
    %v34 = vmul.f32 %v30, %v30
    %v35 = vmul.f32 %v33, 0.5
    %v36 = vmul.f32 %v34, 0.5
    %v37 = vsub.f32 %v29, 0.5
    %v38 = vsub.f32 %v30, 0.5
    %v39 = vsel %vm31, %v35, %v37
    %v40 = vsel %vm32, %v36, %v38
    %41 = vst [vmem:[#allocation5] sm:$0xff] %v39
    %42 = vst [vmem:[#allocation5 + $0x8] sm:$0xff] %v40
    // Predicated region
    $region10: #{tpu_custom_call.1} parent=1 // pred_check
      _
    $region11: #{tpu_custom_call.1} parent=1 // pred_check_branch
      %44 = sbr.rel (0) target = $region13
    $region12: #{tpu_custom_call.1} parent=1 // pred_region
      %46 = vsyncadd [#allocation4], 0
      %s47 = sshll.u32 [#allocation5], 4
      %s48 = int_to_ptr.vmem [resolvable:$true] %s47
      %s49 = sshll.u32 %s1, 4
      %s50 = int_to_ptr.hbm [resolvable:$true] %s49
      %55 = dma.vmem_to_hbm [thread:$0]  %s48, 256, %s50, [#allocation4], 128, 128, 8
    $region13: #{tpu_custom_call.1} parent=1 // pred_fallthru
      _
    // Predicated region
    $region14: #{tpu_custom_call.1} parent=1 // pred_check
      _
    $region15: #{tpu_custom_call.1} parent=1 // pred_check_branch
      %57 = sbr.rel (0) target = $region17
    $region16: #{tpu_custom_call.1} parent=1 // pred_region
      %59 = dma.done [#allocation4], 256
    $region17: #{tpu_custom_call.1} parent=1 // pred_fallthru
      _
    %60 = vsyncpa [#allocation3], 1
    %61 = vsyncpa [#allocation4], 1

</llo_original>
